<compile_context>
chip_gen: v5e
topology: v5e:2x2
jax: 0.10.0
libtpu: 0.0.40
codegen_flags: <defaults>
</compile_context>

<pallas_src>
import functools

import numpy as np
import jax
import jax.numpy as jnp
from jax.experimental import pallas as pl
from jax.experimental.pallas import tpu as pltpu

LRELU_SLOPE = 0.1
R0 = 16            # space-to-depth fold for the Cin=1 first layer
T_TILE = 512       # output time rows per grid step (multiple of 8)

# (Cin, Cout, K, stride, groups, padding) for each conv in DiscriminatorS.convs
LAYER_CFG = [
    (1,    128,  15, 1, 1,  7),
    (128,  128,  41, 2, 4,  20),
    (128,  256,  41, 2, 16, 20),
    (256,  512,  41, 2, 16, 20) if False else (256, 512, 41, 4, 16, 20),
    (512,  1024, 41, 4, 16, 20),
    (1024, 1024, 41, 1, 16, 20),
    (1024, 1024, 5,  1, 1,  2),
]
POST_CFG = (1024, 1, 3, 1, 1, 1)


# --------------------------------------------------------------------------------------
# per-layer tiling plan
# --------------------------------------------------------------------------------------
def _plan(cfg):
    Cin, Cout, K, s, G, P = cfg
    if Cin == 1:                                   # first layer: space-to-depth by R0
        r = R0
        Q = (r - 1 + K - 1) // r + 1               # folded taps
        return dict(first=True, fold=r, S=1, C_dim=r, C_in_blk=r,
                    C_out_blk=r * Cout, num_ct=1, grouped=False, Q=Q, r_out=r)
    Cin_g, Cout_g = Cin // G, Cout // G
    Q = (K - 1) // s + 1                           # folded taps after the stride fold
    if G > 1:
        ng = max(1, min(G, 256 // max(1, Cout_g)))  # groups per output tile
        while G % ng != 0:
            ng -= 1
        num_ct = G // ng
        C_out_blk = ng * Cout_g
        C_in_blk = ng * Cin_g
    else:
        num_ct = Cout // 256 if (Cout >= 256 and Cout % 256 == 0) else 1
        C_out_blk = Cout // num_ct
        C_in_blk = Cin
    grouped = (G > 1 and num_ct > 1)               # input channel block follows the ct tile
    return dict(first=False, fold=s, S=s, C_dim=Cin, C_in_blk=C_in_blk,
                C_out_blk=C_out_blk, num_ct=num_ct, grouped=grouped, Q=Q, r_out=1)


# --------------------------------------------------------------------------------------
# weight packing (block-diagonal over groups, taps re-indexed for the stride fold)
# --------------------------------------------------------------------------------------
def _pack_weights(W, b, cfg, plan):
    Cin, Cout, K, s, G, P = cfg
    Q, S = plan["Q"], plan["S"]
    Cib, Cob, num_ct = plan["C_in_blk"], plan["C_out_blk"], plan["num_ct"]

    if plan["first"]:
        r = plan["fold"]
        q = np.arange(Q)[:, None, None]
        ci = np.arange(r)[None, :, None]
        oo = np.arange(r * Cout)[None, None, :]
        p, o = oo // Cout, oo % Cout
        k = q * r + ci - p
        valid = (k >= 0) & (k < K)
        Wp = W[o, 0, np.clip(k, 0, K - 1)]
        Wp = jnp.where(jnp.asarray(valid), Wp, 0.0)
        Wp = Wp.reshape(1, Q, S * Cib, Cob).astype(jnp.bfloat16)
        bp = jnp.tile(b, r).reshape(1, 1, Cob).astype(jnp.float32)
        return Wp, bp

    Cin_g, Cout_g = Cin // G, Cout // G
    ct = np.arange(num_ct)[:, None, None, None]
    q = np.arange(Q)[None, :, None, None]
    ji = np.arange(S * Cib)[None, None, :, None]
    o = np.arange(Cob)[None, None, None, :]
    j, ci = ji // Cib, ji % Cib
    k = q * s + j
    cout = ct * Cob + o
    g = cout // Cout_g
    cin_global = (ct * Cib + ci) if plan["grouped"] else ci
    c_local = cin_global - g * Cin_g
    valid = (k < K) & (c_local >= 0) & (c_local < Cin_g)
    Wp = W[cout, np.clip(c_local, 0, Cin_g - 1), np.clip(k, 0, K - 1)]
    Wp = jnp.where(jnp.asarray(valid), Wp, 0.0).astype(jnp.bfloat16)
    bp = b.reshape(num_ct, 1, Cob).astype(jnp.float32)
    return Wp, bp


# --------------------------------------------------------------------------------------
# the Pallas kernel: one (cout tile, batch*time tile) block of a grouped strided conv
# --------------------------------------------------------------------------------------
def _conv_kernel(x_ref, w_ref, b_ref, o_ref, *, Q, S, T_t, lrelu):
    """
    x_ref: (1, S, W_f, C_in_blk)  bf16   (W_f = T_t + Q - 1 halo'd window)
    w_ref: (1, Q, S*C_in_blk, C_out_blk) bf16  (block-diagonal over packed groups)
    b_ref: (1, 1, C_out_blk)      f32
    o_ref: (1, T_t, C_out_blk)
    """
    cob = o_ref.shape[-1]
    acc = jnp.zeros((T_t, cob), jnp.float32)
    for q in range(Q):
        if S == 1:
            lhs = x_ref[0, 0, q:q + T_t, :]
        else:
            # lane-concat of the S stride phases: pieces are 128-lane aligned -> free
            lhs = jnp.concatenate(
                [x_ref[0, j, q:q + T_t, :] for j in range(S)], axis=-1)
        acc = acc + jnp.dot(lhs, w_ref[0, q, :, :],
                            preferred_element_type=jnp.float32)
    acc = acc + b_ref[0, 0, :][None, :]
    if lrelu:
        acc = jnp.where(acc >= 0.0, acc, LRELU_SLOPE * acc)
    o_ref[0, :, :] = acc.astype(o_ref.dtype)


# --------------------------------------------------------------------------------------
# one conv layer: glue (pad, free stride-fold reshape, halo window) + pallas_call
# --------------------------------------------------------------------------------------
def conv_layer(x, W, b, cfg, *, lrelu, out_dtype=jnp.bfloat16, t_tile=T_TILE):
    Cin, Cout, K, s, G, P = cfg
    B, T, _ = x.shape
    plan = _plan(cfg)
    Q, S, fold = plan["Q"], plan["S"], plan["fold"]
    Cib, Cob = plan["C_in_blk"], plan["C_out_blk"]
    num_ct, grouped = plan["num_ct"], plan["grouped"]
    C_dim, r_out = plan["C_dim"], plan["r_out"]

    T_out = (T + 2 * P - K) // s + 1
    T_out_k = -(-T_out // r_out)                       # kernel output rows
    T_t = min(t_tile, -(-T_out_k // 8) * 8)
    n_tt = -(-T_out_k // T_t)
    L_f = n_tt * T_t + Q - 1                           # folded input rows needed
    total = L_f * fold
    rpad = total - P - T
    assert rpad >= 0

    Wp, bp = _pack_weights(W, b, cfg, plan)

    xp = jnp.pad(x.astype(jnp.bfloat16), ((0, 0), (P, rpad), (0, 0)))
    x4 = xp.reshape(B, L_f, S, C_dim)                  # free reshape (stride fold)
    W_f = T_t + Q - 1
    # TODO(synk): the halo'd window extraction below is one extra (~1.05x) activation
    # copy in HBM; element-offset BlockSpecs or a manual-DMA pipeline could remove it.
    idx = np.arange(n_tt)[:, None] * T_t + np.arange(W_f)[None, :]
    xw = jnp.moveaxis(x4[:, idx], 3, 2).reshape(B * n_tt, S, W_f, C_dim)

    if grouped:
        x_map = lambda ct, bi: (bi, 0, 0, ct)
    else:
        x_map = lambda ct, bi: (bi, 0, 0, 0)

    kern = functools.partial(_conv_kernel, Q=Q, S=S, T_t=T_t, lrelu=lrelu)
    out = pl.pallas_call(
        kern,
        out_shape=jax.ShapeDtypeStruct((B * n_tt, T_t, num_ct * Cob), out_dtype),
        grid=(num_ct, B * n_tt),
        in_specs=[
            pl.BlockSpec((1, S, W_f, Cib), x_map),
            pl.BlockSpec((1, Q, S * Cib, Cob), lambda ct, bi: (ct, 0, 0, 0)),
            pl.BlockSpec((1, 1, Cob), lambda ct, bi: (ct, 0, 0)),
        ],
        out_specs=pl.BlockSpec((1, T_t, Cob), lambda ct, bi: (bi, 0, ct)),
        compiler_params=pltpu.CompilerParams(
            dimension_semantics=("parallel", "parallel"),
            vmem_limit_bytes=40 * 1024 * 1024),
    )(xw, Wp, bp)

    y = out.reshape(B, n_tt * T_t, num_ct * Cob)[:, :T_out_k]
    if r_out > 1:                                       # undo the space-to-depth fold
        y = y.reshape(B, T_out_k * r_out, Cout)[:, :T_out]
    return y


# --------------------------------------------------------------------------------------
# full forward (matches torch DiscriminatorS.forward semantics)
# --------------------------------------------------------------------------------------
def discriminator_s_forward(x_nct, params, *, t_tile=T_TILE):
    """x_nct: (B, 1, T) PyTorch NCT layout.  Returns (flattened_logits, fmap)."""
    B = x_nct.shape[0]
    h = jnp.transpose(x_nct, (0, 2, 1))                 # channels-last (B, T, 1)
    cfgs = LAYER_CFG + [POST_CFG]
    wbs = list(params["convs"]) + [params["conv_post"]]
    feats = []
    for li, (cfg, (W, b)) in enumerate(zip(cfgs, wbs)):
        last = li == len(cfgs) - 1
        h = conv_layer(h, W, b, cfg, lrelu=not last,
                       out_dtype=jnp.float32 if last else jnp.bfloat16,
                       t_tile=t_tile)
        feats.append(h)
    # torch-layout (B, C, T) fmap produced lazily at the end, in f32
    fmap = [jnp.transpose(f.astype(jnp.float32), (0, 2, 1)) for f in feats]
    x_out = feats[-1].astype(jnp.float32).reshape(B, -1)   # torch.flatten(x, 1, -1)
    return x_out, fmap


# --------------------------------------------------------------------------------------
# deterministic synthetic parameters (no checkpoint)
# --------------------------------------------------------------------------------------
def init_params(key):
    convs = []
    for cfg in LAYER_CFG:
        Cin, Cout, K, s, G, P = cfg
        key, kw, kb = jax.random.split(key, 3)
        fan_in = (Cin // G) * K
        W = (2.0 / fan_in) ** 0.5 * jax.random.normal(kw, (Cout, Cin // G, K), jnp.float32)
        b = 0.05 * jax.random.normal(kb, (Cout,), jnp.float32)
        convs.append((W, b))
    Cin, Cout, K, s, G, P = POST_CFG
    key, kw, kb = jax.random.split(key, 3)
    fan_in = (Cin // G) * K
    Wp = (2.0 / fan_in) ** 0.5 * jax.random.normal(kw, (Cout, Cin // G, K), jnp.float32)
    bp = 0.05 * jax.random.normal(kb, (Cout,), jnp.float32)
    return {"convs": convs, "conv_post": (Wp, bp)}


# --------------------------------------------------------------------------------------
# reference: torch forward with the same numerics policy (bf16 storage, f32 accumulate)
# --------------------------------------------------------------------------------------
def ref_forward(x_nct, params):
    fmap = []
    h = x_nct.astype(jnp.float32)
    cfgs = LAYER_CFG + [POST_CFG]
    wbs = list(params["convs"]) + [params["conv_post"]]
    for li, (cfg, (W, b)) in enumerate(zip(cfgs, wbs)):
        _, _, K, s, G, P = cfg
        hq = h.astype(jnp.bfloat16).astype(jnp.float32)
        Wq = W.astype(jnp.bfloat16).astype(jnp.float32)
        y = jax.lax.conv_general_dilated(
            hq, Wq, window_strides=(s,), padding=[(P, P)],
            dimension_numbers=("NCH", "OIH", "NCH"), feature_group_count=G)
        y = y + b[None, :, None]
        if li < len(cfgs) - 1:
            y = jnp.where(y >= 0.0, y, LRELU_SLOPE * y)
        fmap.append(y)
        h = y
    return h.reshape(h.shape[0], -1), fmap


if __name__ == "__main__":
    key = jax.random.PRNGKey(0)
    kx, kp = jax.random.split(key)
    B, T = 2, 256
    x = jax.random.normal(kx, (B, 1, T), jnp.float32)   # (B, 1, T) like the torch module
    params = init_params(kp)

    out, fmap = discriminator_s_forward(x, params)
    out = jax.block_until_ready(out)

    out_ref, fmap_ref = ref_forward(x, params)
    assert out.shape == out_ref.shape
    np.testing.assert_allclose(np.asarray(out), np.asarray(out_ref), rtol=2e-2, atol=2e-2)
    for a, r in zip(fmap, fmap_ref):
        assert a.shape == r.shape
        np.testing.assert_allclose(np.asarray(a), np.asarray(r), rtol=2e-2, atol=2e-2)
    print("KERNEL_OK")
</pallas_src>

<mosaic_0001>
module attributes {stable_mosaic.version = 11 : i64} {
  func.func @_conv_kernel(%arg0: i32, %arg1: i32, %arg2: memref<1x1x17x16xbf16, #tpu.memory_space<vmem>>, %arg3: memref<1x2x16x2048xbf16, #tpu.memory_space<vmem>>, %arg4: memref<1x1x2048xf32, #tpu.memory_space<vmem>>, %arg5: memref<1x16x2048xbf16, #tpu.memory_space<vmem>>) attributes {dimension_semantics = [#tpu.dimension_semantics<parallel>, #tpu.dimension_semantics<parallel>], iteration_bounds = array<i64: 1, 2>, scalar_prefetch = 0 : i64, scratch_operands = 0 : i64, tpu.core_type = #tpu.core_type<tc>, window_params = [{transform_indices = @transform_0, window_bounds = array<i64: 1, 1, 17, 16>}, {transform_indices = @transform_1, window_bounds = array<i64: 1, 2, 16, 2048>}, {transform_indices = @transform_2, window_bounds = array<i64: 1, 1, 2048>}, {transform_indices = @transform_3, window_bounds = array<i64: 1, 16, 2048>}]} {
    %cst = arith.constant 0.000000e+00 : f32
    %0 = vector.broadcast %cst : f32 to vector<16x2048xf32>
    %c0 = arith.constant 0 : index
    %c0_0 = arith.constant 0 : index
    %c0_1 = arith.constant 0 : index
    %c0_2 = arith.constant 0 : index
    %1 = vector.load %arg2[%c0, %c0_0, %c0_1, %c0_2] : memref<1x1x17x16xbf16, #tpu.memory_space<vmem>>, vector<1x1x16x16xbf16>
    %2 = vector.shape_cast %1 : vector<1x1x16x16xbf16> to vector<16x16xbf16>
    %c0_3 = arith.constant 0 : index
    %c0_4 = arith.constant 0 : index
    %c0_5 = arith.constant 0 : index
    %c0_6 = arith.constant 0 : index
    %3 = vector.load %arg3[%c0_3, %c0_4, %c0_5, %c0_6] : memref<1x2x16x2048xbf16, #tpu.memory_space<vmem>>, vector<1x1x16x2048xbf16>
    %4 = vector.shape_cast %3 : vector<1x1x16x2048xbf16> to vector<16x2048xbf16>
    %cst_7 = arith.constant dense<0.000000e+00> : vector<16x2048xf32>
    %5 = tpu.matmul %2, %4, %cst_7 {dimension_numbers = #tpu.dot_dimension_numbers<[1], [0], [0], [1], [0, 0, 1, 1], [], []>} : vector<16x16xbf16>, vector<16x2048xbf16>, vector<16x2048xf32> -> vector<16x2048xf32>
    %6 = arith.addf %0, %5 : vector<16x2048xf32>
    %c0_8 = arith.constant 0 : index
    %c0_9 = arith.constant 0 : index
    %c1 = arith.constant 1 : index
    %c0_10 = arith.constant 0 : index
    %7 = vector.load %arg2[%c0_8, %c0_9, %c1, %c0_10] : memref<1x1x17x16xbf16, #tpu.memory_space<vmem>>, vector<1x1x16x16xbf16>
    %8 = vector.shape_cast %7 : vector<1x1x16x16xbf16> to vector<16x16xbf16>
    %c0_11 = arith.constant 0 : index
    %c1_12 = arith.constant 1 : index
    %c0_13 = arith.constant 0 : index
    %c0_14 = arith.constant 0 : index
    %9 = vector.load %arg3[%c0_11, %c1_12, %c0_13, %c0_14] : memref<1x2x16x2048xbf16, #tpu.memory_space<vmem>>, vector<1x1x16x2048xbf16>
    %10 = vector.shape_cast %9 : vector<1x1x16x2048xbf16> to vector<16x2048xbf16>
    %cst_15 = arith.constant dense<0.000000e+00> : vector<16x2048xf32>
    %11 = tpu.matmul %8, %10, %cst_15 {dimension_numbers = #tpu.dot_dimension_numbers<[1], [0], [0], [1], [0, 0, 1, 1], [], []>} : vector<16x16xbf16>, vector<16x2048xbf16>, vector<16x2048xf32> -> vector<16x2048xf32>
    %12 = arith.addf %6, %11 : vector<16x2048xf32>
    %c0_16 = arith.constant 0 : index
    %c0_17 = arith.constant 0 : index
    %c0_18 = arith.constant 0 : index
    %13 = vector.load %arg4[%c0_16, %c0_17, %c0_18] : memref<1x1x2048xf32, #tpu.memory_space<vmem>>, vector<1x1x2048xf32>
    %14 = vector.shape_cast %13 : vector<1x1x2048xf32> to vector<2048xf32>
    %15 = vector.shape_cast %14 : vector<2048xf32> to vector<1x2048xf32>
    %16 = vector.broadcast %15 : vector<1x2048xf32> to vector<16x2048xf32>
    %17 = arith.addf %12, %16 : vector<16x2048xf32>
    %cst_19 = arith.constant 0.000000e+00 : f32
    %18 = vector.broadcast %cst_19 : f32 to vector<16x2048xf32>
    %19 = arith.cmpf oge, %17, %18 : vector<16x2048xf32>
    %cst_20 = arith.constant 1.000000e-01 : f32
    %20 = vector.broadcast %cst_20 : f32 to vector<16x2048xf32>
    %21 = arith.mulf %20, %17 : vector<16x2048xf32>
    %22 = arith.select %19, %17, %21 : vector<16x2048xi1>, vector<16x2048xf32>
    %23 = arith.truncf %22 : vector<16x2048xf32> to vector<16x2048xbf16>
    %c0_21 = arith.constant 0 : index
    %c0_22 = arith.constant 0 : index
    %c0_23 = arith.constant 0 : index
    %24 = vector.load %arg5[%c0_21, %c0_22, %c0_23] : memref<1x16x2048xbf16, #tpu.memory_space<vmem>>, vector<1x16x2048xbf16>
    %25 = vector.shape_cast %24 : vector<1x16x2048xbf16> to vector<16x2048xbf16>
    %26 = vector.shape_cast %23 : vector<16x2048xbf16> to vector<1x16x2048xbf16>
    tpu.vector_store %arg5[%c0_21, %c0_22, %c0_23], %26 {strides = array<i32>} : memref<1x16x2048xbf16, #tpu.memory_space<vmem>>, vector<1x16x2048xbf16>,
    return
  }
  func.func @transform_0(%arg0: i32, %arg1: i32) -> (i32, i32, i32, i32) {
    %c0_i32 = arith.constant 0 : i32
    %c0_i32_0 = arith.constant 0 : i32
    %c0_i32_1 = arith.constant 0 : i32
    %c0_i32_2 = arith.constant 0 : i32
    return %arg1, %c0_i32, %c0_i32_0, %c0_i32_1 : i32, i32, i32, i32
  }
  func.func @transform_1(%arg0: i32, %arg1: i32) -> (i32, i32, i32, i32) {
    %c0_i32 = arith.constant 0 : i32
    %c0_i32_0 = arith.constant 0 : i32
    %c0_i32_1 = arith.constant 0 : i32
    %c0_i32_2 = arith.constant 0 : i32
    return %arg0, %c0_i32, %c0_i32_0, %c0_i32_1 : i32, i32, i32, i32
  }
  func.func @transform_2(%arg0: i32, %arg1: i32) -> (i32, i32, i32) {
    %c0_i32 = arith.constant 0 : i32
    %c0_i32_0 = arith.constant 0 : i32
    %c0_i32_1 = arith.constant 0 : i32
    return %arg0, %c0_i32, %c0_i32_0 : i32, i32, i32
  }
  func.func @transform_3(%arg0: i32, %arg1: i32) -> (i32, i32, i32) {
    %c0_i32 = arith.constant 0 : i32
    %c0_i32_0 = arith.constant 0 : i32
    return %arg1, %c0_i32, %arg0 : i32, i32, i32
  }
}

</mosaic_0001>

<llo_original>
// kernel: tpu_custom_call.1
$region0: #{tpu_custom_call.1}
  #allocation0 [shape = 'u32[]', space=smem, size = 0x4, offset = 0x4, fixed_abs, tag = 'smem constant byte address 0x4 - core index']
  #allocation1 [shape = 'u32[72,128]{1,0:T(1,128)}', space=vmem, size = 0x9000, scoped, tag = 'internal scratch']
  %s0 = inlined_call_operand.vmem [shape: bf16[2,1,17,16], index: 0, kind: input, shape index: {}]
  %s1 = inlined_call_operand.hbm [shape: bf16[1,2,16,2048], index: 1, kind: input, shape index: {}]
  %s2 = inlined_call_operand.vmem [shape: f32[1,1,2048], index: 2, kind: input, shape index: {}]
  %s3 = inlined_call_operand.hbm [shape: bf16[2,16,2048], index: 3, kind: output, shape index: {}]
  %s4 = sld [smem:[#allocation0]]
  $region49: #{tpu_custom_call.1} parent=0
    _
  %s6 = ssub.s32 1, %s4
  %s7 = scalar_select 0, %s6, %s4
  $region1: #{tpu_custom_call.1} parent=0
    #allocation2 [shape = 'u8[131072]{0}', space=vmem, size = 0x20000, scoped, tag = 'input window, operand 1, single buffered']
    #allocation3 [shape = 's32[2]{0}', space=sflag, size = 0x8, scoped, tag = 'scoped memory for tpu_custom_call.1']
    #allocation4 [shape = 's32[2]{0}', space=sflag, size = 0x8, scoped, tag = 'scoped memory for tpu_custom_call.1']
    #allocation5 [shape = 'u8[131072]{0}', space=vmem, size = 0x20000, scoped, tag = 'output window, operand 0']
    %8 = vsyncpa [#allocation3], 0
    %9 = vsyncpa [#allocation4], 0
    %s10 = scalar_lea.sflag [#allocation4], 1
    %11 = vsyncpa %s10, 0
    loop: start=0, step=1, limit=4
    $region2: #{tpu_custom_call.1} parent=1 // loop_pre_header
      _
    $region3: #{tpu_custom_call.1} parent=1 // loop_header
      %s13 = sphi 0, %s17
      %p14 = scmp.ge.s32.totalorder %s13, 4
      %s20 = sphi 0, %s32
      %s21 = sphi 0, %s28
      %s22 = sphi 0, %s20
      %s23 = sphi 0, %s21
      %s24 = sphi 0, %s22
      %s25 = sphi 0, %s23
      %s35 = sphi 0, %s37
      %s38 = sphi 0, %s35
      %s39 = sphi 0, %s38
      %s55 = sphi 0, %s39
      %s61 = sphi 0, %s63
      %s64 = sphi 0, %s61
      %s65 = sphi 0, %s64
      %s81 = sphi 0, %s65
      %s87 = sphi 0, %s89
      %s90 = sphi 0, %s87
      %s91 = sphi 0, %s90
      %s107 = sphi 0, %s91
      %s115 = sphi 0, %s117
      %s118 = sphi 0, %s115
      %s119 = sphi 0, %s118
      %s135 = sphi 0, %s119
    $region4: #{tpu_custom_call.1} parent=1 // loop_header_branch
      %16 = sbr.rel (%p14) target = $region8
    $region5: #{tpu_custom_call.1} parent=1 // loop_body
      %s18 = ssub.s32 %s13, 1
      %s19 = ssub.s32 %s13, 2
      %s26 = sadd.s32 1, %s21
      %p27 = scmp.ge.s32.totalorder %s26, 2
      %s28 = scalar_select %p27, 0, %s26
      %s29 = sadd.s32 1, %s20
      %s30 = scalar_select %p27, %s29, %s20
      %p31 = scmp.ge.s32.totalorder %s30, 1
      %s32 = scalar_select %p31, 0, %s30
      %s33 = ssub.s32 %s21, %s28
      %p34 = scmp.eq.s32.totalorder %s33, 0
      %s36 = sadd.s32 %s35, 1
      %s37 = scalar_select %p34, %s35, %s36
      %p40 = pneg %p34
      %p41 = scmp.eq.s32.totalorder %s13, 1
      %p42 = por %p40, %p41
      %p43 = scmp.ne.s32.totalorder %s35, %s38
      %p44 = scmp.eq.s32.totalorder %s13, 0
      %p45 = por %p43, %p44
      %p46 = scmp.ne.s32.totalorder %s35, %s38
      %p47 = scmp.eq.s32.totalorder %s18, 1
      %p48 = por %p46, %p47
      %p49 = scmp.ne.s32.totalorder %s38, %s39
      %p50 = scmp.eq.s32.totalorder %s18, 0
      %p51 = por %p49, %p50
      %p52 = scmp.ne.s32.totalorder %s38, %s39
      %p53 = scmp.eq.s32.totalorder %s19, 1
      %p54 = por %p52, %p53
      %p56 = scmp.ne.s32.totalorder %s39, %s55
      %p57 = scmp.eq.s32.totalorder %s19, 0
      %p58 = por %p56, %p57
      %s59 = ssub.s32 %s20, %s32
      %p60 = scmp.eq.s32.totalorder %s59, 0
      %s62 = sadd.s32 %s61, 1
      %s63 = scalar_select %p60, %s61, %s62
      %p66 = pneg %p60
      %p67 = scmp.eq.s32.totalorder %s13, 1
      %p68 = por %p66, %p67
      %p69 = scmp.ne.s32.totalorder %s61, %s64
      %p70 = scmp.eq.s32.totalorder %s13, 0
      %p71 = por %p69, %p70
      %p72 = scmp.ne.s32.totalorder %s61, %s64
      %p73 = scmp.eq.s32.totalorder %s18, 1
      %p74 = por %p72, %p73
      %p75 = scmp.ne.s32.totalorder %s64, %s65
      %p76 = scmp.eq.s32.totalorder %s18, 0
      %p77 = por %p75, %p76
      %p78 = scmp.ne.s32.totalorder %s64, %s65
      %p79 = scmp.eq.s32.totalorder %s19, 1
      %p80 = por %p78, %p79
      %p82 = scmp.ne.s32.totalorder %s65, %s81
      %p83 = scmp.eq.s32.totalorder %s19, 0
      %p84 = por %p82, %p83
      %s85 = ssub.s32 %s20, %s32
      %p86 = scmp.eq.s32.totalorder %s85, 0
      %s88 = sadd.s32 %s87, 1
      %s89 = scalar_select %p86, %s87, %s88
      %p92 = pneg %p86
      %p93 = scmp.eq.s32.totalorder %s13, 1
      %p94 = por %p92, %p93
      %p95 = scmp.ne.s32.totalorder %s87, %s90
      %p96 = scmp.eq.s32.totalorder %s13, 0
      %p97 = por %p95, %p96
      %p98 = scmp.ne.s32.totalorder %s87, %s90
      %p99 = scmp.eq.s32.totalorder %s18, 1
      %p100 = por %p98, %p99
      %p101 = scmp.ne.s32.totalorder %s90, %s91
      %p102 = scmp.eq.s32.totalorder %s18, 0
      %p103 = por %p101, %p102
      %p104 = scmp.ne.s32.totalorder %s90, %s91
      %p105 = scmp.eq.s32.totalorder %s19, 1
      %p106 = por %p104, %p105
      %p108 = scmp.ne.s32.totalorder %s91, %s107
      %p109 = scmp.eq.s32.totalorder %s19, 0
      %p110 = por %p108, %p109
      %s111 = ssub.s32 %s21, %s28
      %s112 = ssub.s32 %s20, %s32
      %s113 = sor.u32 %s111, %s112
      %p114 = scmp.eq.s32.totalorder %s113, 0
      %s116 = sadd.s32 %s115, 1
      %s117 = scalar_select %p114, %s115, %s116
      %p120 = pneg %p114
      %p121 = scmp.eq.s32.totalorder %s13, 1
      %p122 = por %p120, %p121
      %p123 = scmp.ne.s32.totalorder %s115, %s118
      %p124 = scmp.eq.s32.totalorder %s13, 0
      %p125 = por %p123, %p124
      %p126 = scmp.ne.s32.totalorder %s115, %s118
      %p127 = scmp.eq.s32.totalorder %s18, 1
      %p128 = por %p126, %p127
      %p129 = scmp.ne.s32.totalorder %s118, %s119
      %p130 = scmp.eq.s32.totalorder %s18, 0
      %p131 = por %p129, %p130
      %p132 = scmp.ne.s32.totalorder %s118, %s119
      %p133 = scmp.eq.s32.totalorder %s19, 1
      %p134 = por %p132, %p133
      %p136 = scmp.ne.s32.totalorder %s119, %s135
      %p137 = scmp.eq.s32.totalorder %s19, 0
      %p138 = por %p136, %p137
      %p139 = scmp.le.s32.totalorder 1, %s13
      %p140 = scmp.lt.s32.totalorder %s13, 3
      %p141 = pnand %p139, %p140
      %p142 = pneg %p141
      // Predicated region
      $region9: #{tpu_custom_call.1} parent=5 // pred_check
        _
      $region10: #{tpu_custom_call.1} parent=5 // pred_check_branch
        %144 = sbr.rel (%p141) target = $region12
      $region11: #{tpu_custom_call.1} parent=5 // pred_region
        %s145 = ssub.s32 %s13, 1
        // Predicated region
        $region13: #{tpu_custom_call.1} parent=11 // pred_check
          %p146 = pneg %p77
        $region14: #{tpu_custom_call.1} parent=11 // pred_check_branch
          %148 = sbr.rel (%p146) target = $region16
        $region15: #{tpu_custom_call.1} parent=11 // pred_region
          %150 = vsyncadd [#allocation3], 0
          %s151 = smul.addr %s22, 64
          %s152 = smul.addr %s151, 4
          %s153 = scalar_lea.hbm %s1, %s152
          %s154 = sshll.u32 %s153, 4
          %s155 = int_to_ptr.hbm [resolvable:$true] %s154
          %s156 = sshll.u32 [#allocation2], 4
          %s157 = int_to_ptr.vmem [resolvable:$true] %s156
          %162 = dma.hbm_to_vmem [thread:$0]  %s155, 4096, %s157, [#allocation3], 1024, 1024, 64
        $region16: #{tpu_custom_call.1} parent=11 // pred_fallthru
          _
        // Predicated region
        $region17: #{tpu_custom_call.1} parent=11 // pred_check
          %p163 = pneg %p103
        $region18: #{tpu_custom_call.1} parent=11 // pred_check_branch
          %165 = sbr.rel (%p163) target = $region20
        $region19: #{tpu_custom_call.1} parent=11 // pred_region
          %p166 = scmp.lt.s32.totalorder %s22, 0
          %s167 = scalar_select %p166, %s22, 0
          %s168 = smul.addr %s167, 16
          %s169 = scalar_lea.vmem %s2, %s168
        $region20: #{tpu_custom_call.1} parent=11 // pred_fallthru
          _
      $region12: #{tpu_custom_call.1} parent=5 // pred_fallthru
        _
      %p170 = scmp.lt.s32.totalorder %s13, 2
      // Predicated region
      $region21: #{tpu_custom_call.1} parent=5 // pred_check
        %p171 = pneg %p170
      $region22: #{tpu_custom_call.1} parent=5 // pred_check_branch
        %173 = sbr.rel (%p171) target = $region24
      $region23: #{tpu_custom_call.1} parent=5 // pred_region
        // Predicated region
        $region25: #{tpu_custom_call.1} parent=23 // pred_check
          %p174 = pneg %p45
        $region26: #{tpu_custom_call.1} parent=23 // pred_check_branch
          %176 = sbr.rel (%p174) target = $region28
        $region27: #{tpu_custom_call.1} parent=23 // pred_region
          %p177 = scmp.lt.s32.totalorder %s21, 1
          %s178 = scalar_select %p177, %s21, 1
          %s179 = smul.addr %s178, 3
          %s180 = smul.addr %s179, 4
          %s181 = scalar_lea.vmem %s0, %s180
        $region28: #{tpu_custom_call.1} parent=23 // pred_fallthru
          _
      $region24: #{tpu_custom_call.1} parent=5 // pred_fallthru
        _
      %p182 = scmp.le.s32.totalorder 1, %s13
      %p183 = scmp.lt.s32.totalorder %s13, 3
      %p184 = pnand %p182, %p183
      %p185 = pneg %p184
      // Predicated region
      $region29: #{tpu_custom_call.1} parent=5 // pred_check
        _
      $region30: #{tpu_custom_call.1} parent=5 // pred_check_branch
        %187 = sbr.rel (%p184) target = $region32
      $region31: #{tpu_custom_call.1} parent=5 // pred_region
        %s188 = ssub.s32 %s13, 1
        // Predicated region
        $region33: #{tpu_custom_call.1} parent=31 // pred_check
          %p189 = pneg %p77
        $region34: #{tpu_custom_call.1} parent=31 // pred_check_branch
          %191 = sbr.rel (%p189) target = $region36
        $region35: #{tpu_custom_call.1} parent=31 // pred_region
          %193 = dma.done [#allocation3], 4096
        $region36: #{tpu_custom_call.1} parent=31 // pred_fallthru
          _
        %p194 = scmp.lt.s32.totalorder %s23, 1
        %s195 = scalar_select %p194, %s23, 1
        %s196 = smul.addr %s195, 3
        %s197 = smul.addr %s196, 4
        %s198 = scalar_lea.vmem %s0, %s197
        %p199 = pneg %p51
        %p200 = pneg %p48
        %p201 = pneg %p77
        %p202 = pneg %p74
        %p203 = scmp.lt.s32.totalorder %s22, 0
        %s204 = scalar_select %p203, %s22, 0
        %s205 = smul.addr %s204, 16
        %s206 = scalar_lea.vmem %s2, %s205
        %p207 = pneg %p103
        %p208 = pneg %p100
        %p209 = pneg %p131
        %p210 = pneg %p128
        %s211 = sand.u32 %s118, 1
        %s212 = scalar_lea.sflag [#allocation4], %s211
        %s213 = sand.u32 %s118, 1
        %s214 = smul.addr %s213, 128
        %s215 = scalar_lea.vmem [#allocation5], %s214
        %p216 = scmp.lt.s32.totalorder %s23, 1
        %s217 = scalar_select %p216, %s23, 1
        %s218 = smul.addr %s217, 3
        %s219 = smul.addr %s218, 4
        %s220 = scalar_lea.vmem %s0, %s219
        %p221 = scmp.lt.s32.totalorder %s22, 0
        %s222 = scalar_select %p221, %s22, 0
        %s223 = smul.addr %s222, 16
        %s224 = scalar_lea.vmem %s2, %s223
        %s225 = smul.u32 16, %s22
        %v227 = vld [vmem:[%s220] sm:$0xf]
        %v228 = vld [vmem:[%s220 + $0x4] sm:$0xf]
        %v229 = vld [vmem:[#allocation2] sm:$0xff]
        %v230 = vld [vmem:[#allocation2 + $0x8] sm:$0xff]
        %v231 = vld [vmem:[#allocation2 + $0x10] sm:$0xff]
        %v232 = vld [vmem:[#allocation2 + $0x18] sm:$0xff]
        %v233 = vld [vmem:[#allocation2 + $0x20] sm:$0xff]
        %v234 = vld [vmem:[#allocation2 + $0x28] sm:$0xff]
        %v235 = vld [vmem:[#allocation2 + $0x30] sm:$0xff]
        %v236 = vld [vmem:[#allocation2 + $0x38] sm:$0xff]
        %v237 = vld [vmem:[#allocation2 + $0x40] sm:$0xff]
        %v238 = vld [vmem:[#allocation2 + $0x48] sm:$0xff]
        %v239 = vld [vmem:[#allocation2 + $0x50] sm:$0xff]
        %v240 = vld [vmem:[#allocation2 + $0x58] sm:$0xff]
        %v241 = vld [vmem:[#allocation2 + $0x60] sm:$0xff]
        %v242 = vld [vmem:[#allocation2 + $0x68] sm:$0xff]
        %v243 = vld [vmem:[#allocation2 + $0x70] sm:$0xff]
        %v244 = vld [vmem:[#allocation2 + $0x78] sm:$0xff]
        %v245 = vld [vmem:[%s220 + $0x8] sm:$0x1]
        %s246 = scalar_lea.vmem [#allocation2], 128
        %v247 = vld [vmem:[%s246] sm:$0xff]
        %v248 = vld [vmem:[%s246 + $0x8] sm:$0xff]
        %v249 = vld [vmem:[%s246 + $0x10] sm:$0xff]
        %v250 = vld [vmem:[%s246 + $0x18] sm:$0xff]
        %v251 = vld [vmem:[%s246 + $0x20] sm:$0xff]
        %v252 = vld [vmem:[%s246 + $0x28] sm:$0xff]
        %v253 = vld [vmem:[%s246 + $0x30] sm:$0xff]
        %v254 = vld [vmem:[%s246 + $0x38] sm:$0xff]
        %v255 = vld [vmem:[%s246 + $0x40] sm:$0xff]
        %v256 = vld [vmem:[%s246 + $0x48] sm:$0xff]
        %v257 = vld [vmem:[%s246 + $0x50] sm:$0xff]
        %v258 = vld [vmem:[%s246 + $0x58] sm:$0xff]
        %v259 = vld [vmem:[%s246 + $0x60] sm:$0xff]
        %v260 = vld [vmem:[%s246 + $0x68] sm:$0xff]
        %v261 = vld [vmem:[%s246 + $0x70] sm:$0xff]
        %v262 = vld [vmem:[%s246 + $0x78] sm:$0xff]
        %v266 = vunpack.c.l.b16 %v227
        %v267 = vunpack.c.l.b16 %v228
        %v268 = vunpack.c.l.b16 %v245
        %v269 = vpack.c.b16 %v267, %v266
        %v270 = vpack.c.b16 %v268, %v268
        %vm271 = vsmask.f32 7424
        %v273 = vshrl.u32 %v269, 16
        %v275 = vshll.u32 %v269, 16
        %v277 = vrot.slane %v275, 1
        %v278 = vor.u32 %v273, %v277
        %v280 = vshll.u32 %v270, 16
        %v282 = vrot.slane %v280, 1
        %v283 = vsel %vm271, %v278, %v282
        %v300 = vunpack.c.l.b16 %v247
        %v301 = vunpack.c.h.b16 %v247
        %v302 = vunpack.c.l.b16 %v248
        %v303 = vunpack.c.h.b16 %v248
        %v304 = vunpack.c.l.b16 %v249
        %v305 = vunpack.c.h.b16 %v249
        %v306 = vunpack.c.l.b16 %v250
        %v307 = vunpack.c.h.b16 %v250
        %v308 = vunpack.c.l.b16 %v251
        %v309 = vunpack.c.h.b16 %v251
        %v310 = vunpack.c.l.b16 %v252
        %v311 = vunpack.c.h.b16 %v252
        %v312 = vunpack.c.l.b16 %v253
        %v313 = vunpack.c.h.b16 %v253
        %v314 = vunpack.c.l.b16 %v254
        %v315 = vunpack.c.h.b16 %v254
        %v316 = vunpack.c.l.b16 %v255
        %v317 = vunpack.c.h.b16 %v255
        %v318 = vunpack.c.l.b16 %v256
        %v319 = vunpack.c.h.b16 %v256
        %v320 = vunpack.c.l.b16 %v257
        %v321 = vunpack.c.h.b16 %v257
        %v322 = vunpack.c.l.b16 %v258
        %v323 = vunpack.c.h.b16 %v258
        %v324 = vunpack.c.l.b16 %v259
        %v325 = vunpack.c.h.b16 %v259
        %v326 = vunpack.c.l.b16 %v260
        %v327 = vunpack.c.h.b16 %v260
        %v328 = vunpack.c.l.b16 %v261
        %v329 = vunpack.c.h.b16 %v261
        %v330 = vunpack.c.l.b16 %v262
        %v331 = vunpack.c.h.b16 %v262
        %v332 = vpack.c.b16 %v316, %v300
        %v333 = vpack.c.b16 %v317, %v301
        %v334 = vpack.c.b16 %v318, %v302
        %v335 = vpack.c.b16 %v319, %v303
        %v336 = vpack.c.b16 %v320, %v304
        %v337 = vpack.c.b16 %v321, %v305
        %v338 = vpack.c.b16 %v322, %v306
        %v339 = vpack.c.b16 %v323, %v307
        %v340 = vpack.c.b16 %v324, %v308
        %v341 = vpack.c.b16 %v325, %v309
        %v342 = vpack.c.b16 %v326, %v310
        %v343 = vpack.c.b16 %v327, %v311
        %v344 = vpack.c.b16 %v328, %v312
        %v345 = vpack.c.b16 %v329, %v313
        %v346 = vpack.c.b16 %v330, %v314
        %v347 = vpack.c.b16 %v331, %v315
        %vm364 = vcmask 130048
        %v366 = vsel %vm364, %v283, 0
        %368 = vmatpush.bf16.msra.mxu0 0
        %369 = vmatpush.bf16.msra.mxu0 0
        %370 = vmatpush.bf16.msra.mxu0 0
        %371 = vmatpush.bf16.msra.mxu0 0
        %372 = vmatpush.bf16.msra.mxu0 0
        %373 = vmatpush.bf16.msra.mxu0 0
        %374 = vmatpush.bf16.msra.mxu0 0
        %375 = vmatpush.bf16.msra.mxu0 %v332
        %376 = vmatmul.bf16.gmra.mxu0 %v366
        %v377 = vpop.f32.mrf.mxu0
        %v378 = vadd.f32 0.0, %v377
        %v379 = vpop.f32.mrf.mxu0
        %v380 = vadd.f32 0.0, %v379
        %381 = vdwg.mxu0
        %382 = vmatpush.bf16.msra.mxu0 0
        %383 = vmatpush.bf16.msra.mxu0 0
        %384 = vmatpush.bf16.msra.mxu0 0
        %385 = vmatpush.bf16.msra.mxu0 0
        %386 = vmatpush.bf16.msra.mxu0 0
        %387 = vmatpush.bf16.msra.mxu0 0
        %388 = vmatpush.bf16.msra.mxu0 0
        %389 = vmatpush.bf16.msra.mxu0 %v333
        %390 = vmatmul.bf16.gmra.mxu0 %v366
        %v391 = vpop.f32.mrf.mxu0
        %v392 = vadd.f32 0.0, %v391
        %v393 = vpop.f32.mrf.mxu0
        %v394 = vadd.f32 0.0, %v393
        %395 = vdwg.mxu0
        %396 = vmatpush.bf16.msra.mxu0 0
        %397 = vmatpush.bf16.msra.mxu0 0
        %398 = vmatpush.bf16.msra.mxu0 0
        %399 = vmatpush.bf16.msra.mxu0 0
        %400 = vmatpush.bf16.msra.mxu0 0
        %401 = vmatpush.bf16.msra.mxu0 0
        %402 = vmatpush.bf16.msra.mxu0 0
        %403 = vmatpush.bf16.msra.mxu0 %v334
        %404 = vmatmul.bf16.gmra.mxu0 %v366
        %v405 = vpop.f32.mrf.mxu0
        %v406 = vadd.f32 0.0, %v405
        %v407 = vpop.f32.mrf.mxu0
        %v408 = vadd.f32 0.0, %v407
        %409 = vdwg.mxu0
        %410 = vmatpush.bf16.msra.mxu0 0
        %411 = vmatpush.bf16.msra.mxu0 0
        %412 = vmatpush.bf16.msra.mxu0 0
        %413 = vmatpush.bf16.msra.mxu0 0
        %414 = vmatpush.bf16.msra.mxu0 0
        %415 = vmatpush.bf16.msra.mxu0 0
        %416 = vmatpush.bf16.msra.mxu0 0
        %417 = vmatpush.bf16.msra.mxu0 %v335
        %418 = vmatmul.bf16.gmra.mxu0 %v366
        %v419 = vpop.f32.mrf.mxu0
        %v420 = vadd.f32 0.0, %v419
        %v421 = vpop.f32.mrf.mxu0
        %v422 = vadd.f32 0.0, %v421
        %423 = vdwg.mxu0
        %424 = vmatpush.bf16.msra.mxu0 0
        %425 = vmatpush.bf16.msra.mxu0 0
        %426 = vmatpush.bf16.msra.mxu0 0
        %427 = vmatpush.bf16.msra.mxu0 0
        %428 = vmatpush.bf16.msra.mxu0 0
        %429 = vmatpush.bf16.msra.mxu0 0
        %430 = vmatpush.bf16.msra.mxu0 0
        %431 = vmatpush.bf16.msra.mxu0 %v336
        %432 = vmatmul.bf16.gmra.mxu0 %v366
        %v433 = vpop.f32.mrf.mxu0
        %v434 = vadd.f32 0.0, %v433
        %v435 = vpop.f32.mrf.mxu0
        %v436 = vadd.f32 0.0, %v435
        %437 = vdwg.mxu0
        %438 = vmatpush.bf16.msra.mxu0 0
        %439 = vmatpush.bf16.msra.mxu0 0
        %440 = vmatpush.bf16.msra.mxu0 0
        %441 = vmatpush.bf16.msra.mxu0 0
        %442 = vmatpush.bf16.msra.mxu0 0
        %443 = vmatpush.bf16.msra.mxu0 0
        %444 = vmatpush.bf16.msra.mxu0 0
        %445 = vmatpush.bf16.msra.mxu0 %v337
        %446 = vmatmul.bf16.gmra.mxu0 %v366
        %v447 = vpop.f32.mrf.mxu0
        %v448 = vadd.f32 0.0, %v447
        %v449 = vpop.f32.mrf.mxu0
        %v450 = vadd.f32 0.0, %v449
        %451 = vdwg.mxu0
        %452 = vmatpush.bf16.msra.mxu0 0
        %453 = vmatpush.bf16.msra.mxu0 0
        %454 = vmatpush.bf16.msra.mxu0 0
        %455 = vmatpush.bf16.msra.mxu0 0
        %456 = vmatpush.bf16.msra.mxu0 0
        %457 = vmatpush.bf16.msra.mxu0 0
        %458 = vmatpush.bf16.msra.mxu0 0
        %459 = vmatpush.bf16.msra.mxu0 %v338
        %460 = vmatmul.bf16.gmra.mxu0 %v366
        %v461 = vpop.f32.mrf.mxu0
        %v462 = vadd.f32 0.0, %v461
        %v463 = vpop.f32.mrf.mxu0
        %v464 = vadd.f32 0.0, %v463
        %465 = vdwg.mxu0
        %466 = vmatpush.bf16.msra.mxu0 0
        %467 = vmatpush.bf16.msra.mxu0 0
        %468 = vmatpush.bf16.msra.mxu0 0
        %469 = vmatpush.bf16.msra.mxu0 0
        %470 = vmatpush.bf16.msra.mxu0 0
        %471 = vmatpush.bf16.msra.mxu0 0
        %472 = vmatpush.bf16.msra.mxu0 0
        %473 = vmatpush.bf16.msra.mxu0 %v339
        %474 = vmatmul.bf16.gmra.mxu0 %v366
        %v475 = vpop.f32.mrf.mxu0
        %v476 = vadd.f32 0.0, %v475
        %v477 = vpop.f32.mrf.mxu0
        %v478 = vadd.f32 0.0, %v477
        %479 = vdwg.mxu0
        %480 = vmatpush.bf16.msra.mxu0 0
        %481 = vmatpush.bf16.msra.mxu0 0
        %482 = vmatpush.bf16.msra.mxu0 0
        %483 = vmatpush.bf16.msra.mxu0 0
        %484 = vmatpush.bf16.msra.mxu0 0
        %485 = vmatpush.bf16.msra.mxu0 0
        %486 = vmatpush.bf16.msra.mxu0 0
        %487 = vmatpush.bf16.msra.mxu0 %v340
        %488 = vmatmul.bf16.gmra.mxu0 %v366
        %v489 = vpop.f32.mrf.mxu0
        %v490 = vadd.f32 0.0, %v489
        %v491 = vpop.f32.mrf.mxu0
        %v492 = vadd.f32 0.0, %v491
        %493 = vdwg.mxu0
        %494 = vmatpush.bf16.msra.mxu0 0
        %495 = vmatpush.bf16.msra.mxu0 0
        %496 = vmatpush.bf16.msra.mxu0 0
        %497 = vmatpush.bf16.msra.mxu0 0
        %498 = vmatpush.bf16.msra.mxu0 0
        %499 = vmatpush.bf16.msra.mxu0 0
        %500 = vmatpush.bf16.msra.mxu0 0
        %501 = vmatpush.bf16.msra.mxu0 %v341
        %502 = vmatmul.bf16.gmra.mxu0 %v366
        %v503 = vpop.f32.mrf.mxu0
        %v504 = vadd.f32 0.0, %v503
        %v505 = vpop.f32.mrf.mxu0
        %v506 = vadd.f32 0.0, %v505
        %507 = vdwg.mxu0
        %508 = vmatpush.bf16.msra.mxu0 0
        %509 = vmatpush.bf16.msra.mxu0 0
        %510 = vmatpush.bf16.msra.mxu0 0
        %511 = vmatpush.bf16.msra.mxu0 0
        %512 = vmatpush.bf16.msra.mxu0 0
        %513 = vmatpush.bf16.msra.mxu0 0
        %514 = vmatpush.bf16.msra.mxu0 0
        %515 = vmatpush.bf16.msra.mxu0 %v342
        %516 = vmatmul.bf16.gmra.mxu0 %v366
        %v517 = vpop.f32.mrf.mxu0
        %v518 = vadd.f32 0.0, %v517
        %v519 = vpop.f32.mrf.mxu0
        %v520 = vadd.f32 0.0, %v519
        %521 = vdwg.mxu0
        %522 = vmatpush.bf16.msra.mxu0 0
        %523 = vmatpush.bf16.msra.mxu0 0
        %524 = vmatpush.bf16.msra.mxu0 0
        %525 = vmatpush.bf16.msra.mxu0 0
        %526 = vmatpush.bf16.msra.mxu0 0
        %527 = vmatpush.bf16.msra.mxu0 0
        %528 = vmatpush.bf16.msra.mxu0 0
        %529 = vmatpush.bf16.msra.mxu0 %v343
        %530 = vmatmul.bf16.gmra.mxu0 %v366
        %v531 = vpop.f32.mrf.mxu0
        %v532 = vadd.f32 0.0, %v531
        %v533 = vpop.f32.mrf.mxu0
        %v534 = vadd.f32 0.0, %v533
        %535 = vdwg.mxu0
        %536 = vmatpush.bf16.msra.mxu0 0
        %537 = vmatpush.bf16.msra.mxu0 0
        %538 = vmatpush.bf16.msra.mxu0 0
        %539 = vmatpush.bf16.msra.mxu0 0
        %540 = vmatpush.bf16.msra.mxu0 0
        %541 = vmatpush.bf16.msra.mxu0 0
        %542 = vmatpush.bf16.msra.mxu0 0
        %543 = vmatpush.bf16.msra.mxu0 %v344
        %544 = vmatmul.bf16.gmra.mxu0 %v366
        %v545 = vpop.f32.mrf.mxu0
        %v546 = vadd.f32 0.0, %v545
        %v547 = vpop.f32.mrf.mxu0
        %v548 = vadd.f32 0.0, %v547
        %549 = vdwg.mxu0
        %550 = vmatpush.bf16.msra.mxu0 0
        %551 = vmatpush.bf16.msra.mxu0 0
        %552 = vmatpush.bf16.msra.mxu0 0
        %553 = vmatpush.bf16.msra.mxu0 0
        %554 = vmatpush.bf16.msra.mxu0 0
        %555 = vmatpush.bf16.msra.mxu0 0
        %556 = vmatpush.bf16.msra.mxu0 0
        %557 = vmatpush.bf16.msra.mxu0 %v345
        %558 = vmatmul.bf16.gmra.mxu0 %v366
        %v559 = vpop.f32.mrf.mxu0
        %v560 = vadd.f32 0.0, %v559
        %v561 = vpop.f32.mrf.mxu0
        %v562 = vadd.f32 0.0, %v561
        %563 = vdwg.mxu0
        %564 = vmatpush.bf16.msra.mxu0 0
        %565 = vmatpush.bf16.msra.mxu0 0
        %566 = vmatpush.bf16.msra.mxu0 0
        %567 = vmatpush.bf16.msra.mxu0 0
        %568 = vmatpush.bf16.msra.mxu0 0
        %569 = vmatpush.bf16.msra.mxu0 0
        %570 = vmatpush.bf16.msra.mxu0 0
        %571 = vmatpush.bf16.msra.mxu0 %v346
        %572 = vmatmul.bf16.gmra.mxu0 %v366
        %v573 = vpop.f32.mrf.mxu0
        %v574 = vadd.f32 0.0, %v573
        %v575 = vpop.f32.mrf.mxu0
        %v576 = vadd.f32 0.0, %v575
        %577 = vdwg.mxu0
        %578 = vmatpush.bf16.msra.mxu0 0
        %579 = vmatpush.bf16.msra.mxu0 0
        %580 = vmatpush.bf16.msra.mxu0 0
        %581 = vmatpush.bf16.msra.mxu0 0
        %582 = vmatpush.bf16.msra.mxu0 0
        %583 = vmatpush.bf16.msra.mxu0 0
        %584 = vmatpush.bf16.msra.mxu0 0
        %585 = vmatpush.bf16.msra.mxu0 %v347
        %586 = vmatmul.bf16.gmra.mxu0 %v366
        %v587 = vpop.f32.mrf.mxu0
        %v588 = vadd.f32 0.0, %v587
        %v589 = vpop.f32.mrf.mxu0
        %v590 = vadd.f32 0.0, %v589
        %591 = vdwg.mxu0
        %v608 = vunpack.c.l.b16 %v229
        %v609 = vunpack.c.h.b16 %v229
        %v610 = vunpack.c.l.b16 %v230
        %v611 = vunpack.c.h.b16 %v230
        %v612 = vunpack.c.l.b16 %v231
        %v613 = vunpack.c.h.b16 %v231
        %v614 = vunpack.c.l.b16 %v232
        %v615 = vunpack.c.h.b16 %v232
        %v616 = vunpack.c.l.b16 %v233
        %v617 = vunpack.c.h.b16 %v233
        %v618 = vunpack.c.l.b16 %v234
        %v619 = vunpack.c.h.b16 %v234
        %v620 = vunpack.c.l.b16 %v235
        %v621 = vunpack.c.h.b16 %v235
        %v622 = vunpack.c.l.b16 %v236
        %v623 = vunpack.c.h.b16 %v236
        %v624 = vunpack.c.l.b16 %v237
        %v625 = vunpack.c.h.b16 %v237
        %v626 = vunpack.c.l.b16 %v238
        %v627 = vunpack.c.h.b16 %v238
        %v628 = vunpack.c.l.b16 %v239
        %v629 = vunpack.c.h.b16 %v239
        %v630 = vunpack.c.l.b16 %v240
        %v631 = vunpack.c.h.b16 %v240
        %v632 = vunpack.c.l.b16 %v241
        %v633 = vunpack.c.h.b16 %v241
        %v634 = vunpack.c.l.b16 %v242
        %v635 = vunpack.c.h.b16 %v242
        %v636 = vunpack.c.l.b16 %v243
        %v637 = vunpack.c.h.b16 %v243
        %v638 = vunpack.c.l.b16 %v244
        %v639 = vunpack.c.h.b16 %v244
        %v640 = vpack.c.b16 %v624, %v608
        %v641 = vpack.c.b16 %v625, %v609
        %v642 = vpack.c.b16 %v626, %v610
        %v643 = vpack.c.b16 %v627, %v611
        %v644 = vpack.c.b16 %v628, %v612
        %v645 = vpack.c.b16 %v629, %v613
        %v646 = vpack.c.b16 %v630, %v614
        %v647 = vpack.c.b16 %v631, %v615
        %v648 = vpack.c.b16 %v632, %v616
        %v649 = vpack.c.b16 %v633, %v617
        %v650 = vpack.c.b16 %v634, %v618
        %v651 = vpack.c.b16 %v635, %v619
        %v652 = vpack.c.b16 %v636, %v620
        %v653 = vpack.c.b16 %v637, %v621
        %v654 = vpack.c.b16 %v638, %v622
        %v655 = vpack.c.b16 %v639, %v623
        %v672 = vsel %vm364, %v269, 0
        %674 = vmatpush.bf16.msra.mxu0 0
        %675 = vmatpush.bf16.msra.mxu0 0
        %676 = vmatpush.bf16.msra.mxu0 0
        %677 = vmatpush.bf16.msra.mxu0 0
        %678 = vmatpush.bf16.msra.mxu0 0
        %679 = vmatpush.bf16.msra.mxu0 0
        %680 = vmatpush.bf16.msra.mxu0 0
        %681 = vmatpush.bf16.msra.mxu0 %v640
        %682 = vmatmul.bf16.gmra.mxu0 %v672
        %v683 = vpop.f32.mrf.mxu0
        %v684 = vadd.f32 %v378, %v683
        %v685 = vpop.f32.mrf.mxu0
        %v686 = vadd.f32 %v380, %v685
        %687 = vdwg.mxu0
        %688 = vmatpush.bf16.msra.mxu0 0
        %689 = vmatpush.bf16.msra.mxu0 0
        %690 = vmatpush.bf16.msra.mxu0 0
        %691 = vmatpush.bf16.msra.mxu0 0
        %692 = vmatpush.bf16.msra.mxu0 0
        %693 = vmatpush.bf16.msra.mxu0 0
        %694 = vmatpush.bf16.msra.mxu0 0
        %695 = vmatpush.bf16.msra.mxu0 %v641
        %696 = vmatmul.bf16.gmra.mxu0 %v672
        %v697 = vpop.f32.mrf.mxu0
        %v698 = vadd.f32 %v392, %v697
        %v699 = vpop.f32.mrf.mxu0
        %v700 = vadd.f32 %v394, %v699
        %701 = vdwg.mxu0
        %702 = vmatpush.bf16.msra.mxu0 0
        %703 = vmatpush.bf16.msra.mxu0 0
        %704 = vmatpush.bf16.msra.mxu0 0
        %705 = vmatpush.bf16.msra.mxu0 0
        %706 = vmatpush.bf16.msra.mxu0 0
        %707 = vmatpush.bf16.msra.mxu0 0
        %708 = vmatpush.bf16.msra.mxu0 0
        %709 = vmatpush.bf16.msra.mxu0 %v642
        %710 = vmatmul.bf16.gmra.mxu0 %v672
        %v711 = vpop.f32.mrf.mxu0
        %v712 = vadd.f32 %v406, %v711
        %v713 = vpop.f32.mrf.mxu0
        %v714 = vadd.f32 %v408, %v713
        %715 = vdwg.mxu0
        %716 = vmatpush.bf16.msra.mxu0 0
        %717 = vmatpush.bf16.msra.mxu0 0
        %718 = vmatpush.bf16.msra.mxu0 0
        %719 = vmatpush.bf16.msra.mxu0 0
        %720 = vmatpush.bf16.msra.mxu0 0
        %721 = vmatpush.bf16.msra.mxu0 0
        %722 = vmatpush.bf16.msra.mxu0 0
        %723 = vmatpush.bf16.msra.mxu0 %v643
        %724 = vmatmul.bf16.gmra.mxu0 %v672
        %v725 = vpop.f32.mrf.mxu0
        %v726 = vadd.f32 %v420, %v725
        %v727 = vpop.f32.mrf.mxu0
        %v728 = vadd.f32 %v422, %v727
        %729 = vdwg.mxu0
        %730 = vmatpush.bf16.msra.mxu0 0
        %731 = vmatpush.bf16.msra.mxu0 0
        %732 = vmatpush.bf16.msra.mxu0 0
        %733 = vmatpush.bf16.msra.mxu0 0
        %734 = vmatpush.bf16.msra.mxu0 0
        %735 = vmatpush.bf16.msra.mxu0 0
        %736 = vmatpush.bf16.msra.mxu0 0
        %737 = vmatpush.bf16.msra.mxu0 %v644
        %738 = vmatmul.bf16.gmra.mxu0 %v672
        %v739 = vpop.f32.mrf.mxu0
        %v740 = vadd.f32 %v434, %v739
        %v741 = vpop.f32.mrf.mxu0
        %v742 = vadd.f32 %v436, %v741
        %743 = vdwg.mxu0
        %744 = vmatpush.bf16.msra.mxu0 0
        %745 = vmatpush.bf16.msra.mxu0 0
        %746 = vmatpush.bf16.msra.mxu0 0
        %747 = vmatpush.bf16.msra.mxu0 0
        %748 = vmatpush.bf16.msra.mxu0 0
        %749 = vmatpush.bf16.msra.mxu0 0
        %750 = vmatpush.bf16.msra.mxu0 0
        %751 = vmatpush.bf16.msra.mxu0 %v645
        %752 = vmatmul.bf16.gmra.mxu0 %v672
        %v753 = vpop.f32.mrf.mxu0
        %v754 = vadd.f32 %v448, %v753
        %v755 = vpop.f32.mrf.mxu0
        %v756 = vadd.f32 %v450, %v755
        %757 = vdwg.mxu0
        %758 = vmatpush.bf16.msra.mxu0 0
        %759 = vmatpush.bf16.msra.mxu0 0
        %760 = vmatpush.bf16.msra.mxu0 0
        %761 = vmatpush.bf16.msra.mxu0 0
        %762 = vmatpush.bf16.msra.mxu0 0
        %763 = vmatpush.bf16.msra.mxu0 0
        %764 = vmatpush.bf16.msra.mxu0 0
        %765 = vmatpush.bf16.msra.mxu0 %v646
        %766 = vmatmul.bf16.gmra.mxu0 %v672
        %v767 = vpop.f32.mrf.mxu0
        %v768 = vadd.f32 %v462, %v767
        %v769 = vpop.f32.mrf.mxu0
        %v770 = vadd.f32 %v464, %v769
        %771 = vdwg.mxu0
        %772 = vmatpush.bf16.msra.mxu0 0
        %773 = vmatpush.bf16.msra.mxu0 0
        %774 = vmatpush.bf16.msra.mxu0 0
        %775 = vmatpush.bf16.msra.mxu0 0
        %776 = vmatpush.bf16.msra.mxu0 0
        %777 = vmatpush.bf16.msra.mxu0 0
        %778 = vmatpush.bf16.msra.mxu0 0
        %779 = vmatpush.bf16.msra.mxu0 %v647
        %780 = vmatmul.bf16.gmra.mxu0 %v672
        %v781 = vpop.f32.mrf.mxu0
        %v782 = vadd.f32 %v476, %v781
        %v783 = vpop.f32.mrf.mxu0
        %v784 = vadd.f32 %v478, %v783
        %785 = vdwg.mxu0
        %786 = vmatpush.bf16.msra.mxu0 0
        %787 = vmatpush.bf16.msra.mxu0 0
        %788 = vmatpush.bf16.msra.mxu0 0
        %789 = vmatpush.bf16.msra.mxu0 0
        %790 = vmatpush.bf16.msra.mxu0 0
        %791 = vmatpush.bf16.msra.mxu0 0
        %792 = vmatpush.bf16.msra.mxu0 0
        %793 = vmatpush.bf16.msra.mxu0 %v648
        %794 = vmatmul.bf16.gmra.mxu0 %v672
        %v795 = vpop.f32.mrf.mxu0
        %v796 = vadd.f32 %v490, %v795
        %v797 = vpop.f32.mrf.mxu0
        %v798 = vadd.f32 %v492, %v797
        %799 = vdwg.mxu0
        %800 = vmatpush.bf16.msra.mxu0 0
        %801 = vmatpush.bf16.msra.mxu0 0
        %802 = vmatpush.bf16.msra.mxu0 0
        %803 = vmatpush.bf16.msra.mxu0 0
        %804 = vmatpush.bf16.msra.mxu0 0
        %805 = vmatpush.bf16.msra.mxu0 0
        %806 = vmatpush.bf16.msra.mxu0 0
        %807 = vmatpush.bf16.msra.mxu0 %v649
        %808 = vmatmul.bf16.gmra.mxu0 %v672
        %v809 = vpop.f32.mrf.mxu0
        %v810 = vadd.f32 %v504, %v809
        %v811 = vpop.f32.mrf.mxu0
        %v812 = vadd.f32 %v506, %v811
        %813 = vdwg.mxu0
        %814 = vmatpush.bf16.msra.mxu0 0
        %815 = vmatpush.bf16.msra.mxu0 0
        %816 = vmatpush.bf16.msra.mxu0 0
        %817 = vmatpush.bf16.msra.mxu0 0
        %818 = vmatpush.bf16.msra.mxu0 0
        %819 = vmatpush.bf16.msra.mxu0 0
        %820 = vmatpush.bf16.msra.mxu0 0
        %821 = vmatpush.bf16.msra.mxu0 %v650
        %822 = vmatmul.bf16.gmra.mxu0 %v672
        %v823 = vpop.f32.mrf.mxu0
        %v824 = vadd.f32 %v518, %v823
        %v825 = vpop.f32.mrf.mxu0
        %v826 = vadd.f32 %v520, %v825
        %827 = vdwg.mxu0
        %828 = vmatpush.bf16.msra.mxu0 0
        %829 = vmatpush.bf16.msra.mxu0 0
        %830 = vmatpush.bf16.msra.mxu0 0
        %831 = vmatpush.bf16.msra.mxu0 0
        %832 = vmatpush.bf16.msra.mxu0 0
        %833 = vmatpush.bf16.msra.mxu0 0
        %834 = vmatpush.bf16.msra.mxu0 0
        %835 = vmatpush.bf16.msra.mxu0 %v651
        %836 = vmatmul.bf16.gmra.mxu0 %v672
        %v837 = vpop.f32.mrf.mxu0
        %v838 = vadd.f32 %v532, %v837
        %v839 = vpop.f32.mrf.mxu0
        %v840 = vadd.f32 %v534, %v839
        %841 = vdwg.mxu0
        %842 = vmatpush.bf16.msra.mxu0 0
        %843 = vmatpush.bf16.msra.mxu0 0
        %844 = vmatpush.bf16.msra.mxu0 0
        %845 = vmatpush.bf16.msra.mxu0 0
        %846 = vmatpush.bf16.msra.mxu0 0
        %847 = vmatpush.bf16.msra.mxu0 0
        %848 = vmatpush.bf16.msra.mxu0 0
        %849 = vmatpush.bf16.msra.mxu0 %v652
        %850 = vmatmul.bf16.gmra.mxu0 %v672
        %v851 = vpop.f32.mrf.mxu0
        %v852 = vadd.f32 %v546, %v851
        %v853 = vpop.f32.mrf.mxu0
        %v854 = vadd.f32 %v548, %v853
        %855 = vdwg.mxu0
        %856 = vmatpush.bf16.msra.mxu0 0
        %857 = vmatpush.bf16.msra.mxu0 0
        %858 = vmatpush.bf16.msra.mxu0 0
        %859 = vmatpush.bf16.msra.mxu0 0
        %860 = vmatpush.bf16.msra.mxu0 0
        %861 = vmatpush.bf16.msra.mxu0 0
        %862 = vmatpush.bf16.msra.mxu0 0
        %863 = vmatpush.bf16.msra.mxu0 %v653
        %864 = vmatmul.bf16.gmra.mxu0 %v672
        %v865 = vpop.f32.mrf.mxu0
        %v866 = vadd.f32 %v560, %v865
        %v867 = vpop.f32.mrf.mxu0
        %v868 = vadd.f32 %v562, %v867
        %869 = vdwg.mxu0
        %870 = vmatpush.bf16.msra.mxu0 0
        %871 = vmatpush.bf16.msra.mxu0 0
        %872 = vmatpush.bf16.msra.mxu0 0
        %873 = vmatpush.bf16.msra.mxu0 0
        %874 = vmatpush.bf16.msra.mxu0 0
        %875 = vmatpush.bf16.msra.mxu0 0
        %876 = vmatpush.bf16.msra.mxu0 0
        %877 = vmatpush.bf16.msra.mxu0 %v654
        %878 = vmatmul.bf16.gmra.mxu0 %v672
        %v879 = vpop.f32.mrf.mxu0
        %v880 = vadd.f32 %v574, %v879
        %v881 = vpop.f32.mrf.mxu0
        %v882 = vadd.f32 %v576, %v881
        %883 = vdwg.mxu0
        %884 = vmatpush.bf16.msra.mxu0 0
        %885 = vmatpush.bf16.msra.mxu0 0
        %886 = vmatpush.bf16.msra.mxu0 0
        %887 = vmatpush.bf16.msra.mxu0 0
        %888 = vmatpush.bf16.msra.mxu0 0
        %889 = vmatpush.bf16.msra.mxu0 0
        %890 = vmatpush.bf16.msra.mxu0 0
        %891 = vmatpush.bf16.msra.mxu0 %v655
        %892 = vmatmul.bf16.gmra.mxu0 %v672
        %v893 = vpop.f32.mrf.mxu0
        %v894 = vadd.f32 %v588, %v893
        %v895 = vpop.f32.mrf.mxu0
        %v896 = vadd.f32 %v590, %v895
        %897 = vdwg.mxu0
        %v898 = vld [vmem:[%s224] sm:$0xff]
        %v899 = vld [vmem:[%s224 + $0x8] sm:$0xff]
        %v902 = vperm.slane %v898, 0
        %v903 = vperm.slane %v898, 1
        %v904 = vperm.slane %v898, 2
        %v905 = vperm.slane %v898, 3
        %v906 = vperm.slane %v898, 4
        %v907 = vperm.slane %v898, 5
        %v908 = vperm.slane %v898, 6
        %v909 = vperm.slane %v898, 7
        %v910 = vperm.slane %v899, 0
        %v911 = vperm.slane %v899, 1
        %v912 = vperm.slane %v899, 2
        %v913 = vperm.slane %v899, 3
        %v914 = vperm.slane %v899, 4
        %v915 = vperm.slane %v899, 5
        %v916 = vperm.slane %v899, 6
        %v917 = vperm.slane %v899, 7
        %v934 = vadd.f32 %v684, %v902
        %v935 = vadd.f32 %v698, %v903
        %v936 = vadd.f32 %v712, %v904
        %v937 = vadd.f32 %v726, %v905
        %v938 = vadd.f32 %v740, %v906
        %v939 = vadd.f32 %v754, %v907
        %v940 = vadd.f32 %v768, %v908
        %v941 = vadd.f32 %v782, %v909
        %v942 = vadd.f32 %v796, %v910
        %v943 = vadd.f32 %v810, %v911
        %v944 = vadd.f32 %v824, %v912
        %v945 = vadd.f32 %v838, %v913
        %v946 = vadd.f32 %v852, %v914
        %v947 = vadd.f32 %v866, %v915
        %v948 = vadd.f32 %v880, %v916
        %v949 = vadd.f32 %v894, %v917
        %v950 = vadd.f32 %v686, %v902
        %v951 = vadd.f32 %v700, %v903
        %v952 = vadd.f32 %v714, %v904
        %v953 = vadd.f32 %v728, %v905
        %v954 = vadd.f32 %v742, %v906
        %v955 = vadd.f32 %v756, %v907
        %v956 = vadd.f32 %v770, %v908
        %v957 = vadd.f32 %v784, %v909
        %v958 = vadd.f32 %v798, %v910
        %v959 = vadd.f32 %v812, %v911
        %v960 = vadd.f32 %v826, %v912
        %v961 = vadd.f32 %v840, %v913
        %v962 = vadd.f32 %v854, %v914
        %v963 = vadd.f32 %v868, %v915
        %v964 = vadd.f32 %v882, %v916
        %v965 = vadd.f32 %v896, %v917
        %vm966 = vcmp.ge.f32.partialorder %v934, 0.0
        %vm967 = vcmp.ge.f32.partialorder %v935, 0.0
        %vm968 = vcmp.ge.f32.partialorder %v936, 0.0
        %vm969 = vcmp.ge.f32.partialorder %v937, 0.0
        %vm970 = vcmp.ge.f32.partialorder %v938, 0.0
        %vm971 = vcmp.ge.f32.partialorder %v939, 0.0
        %vm972 = vcmp.ge.f32.partialorder %v940, 0.0
        %vm973 = vcmp.ge.f32.partialorder %v941, 0.0
        %vm974 = vcmp.ge.f32.partialorder %v942, 0.0
        %vm975 = vcmp.ge.f32.partialorder %v943, 0.0
        %vm976 = vcmp.ge.f32.partialorder %v944, 0.0
        %vm977 = vcmp.ge.f32.partialorder %v945, 0.0
        %vm978 = vcmp.ge.f32.partialorder %v946, 0.0
        %vm979 = vcmp.ge.f32.partialorder %v947, 0.0
        %vm980 = vcmp.ge.f32.partialorder %v948, 0.0
        %vm981 = vcmp.ge.f32.partialorder %v949, 0.0
        %vm982 = vcmp.ge.f32.partialorder %v950, 0.0
        %vm983 = vcmp.ge.f32.partialorder %v951, 0.0
        %vm984 = vcmp.ge.f32.partialorder %v952, 0.0
        %vm985 = vcmp.ge.f32.partialorder %v953, 0.0
        %vm986 = vcmp.ge.f32.partialorder %v954, 0.0
        %vm987 = vcmp.ge.f32.partialorder %v955, 0.0
        %vm988 = vcmp.ge.f32.partialorder %v956, 0.0
        %vm989 = vcmp.ge.f32.partialorder %v957, 0.0
        %vm990 = vcmp.ge.f32.partialorder %v958, 0.0
        %vm991 = vcmp.ge.f32.partialorder %v959, 0.0
        %vm992 = vcmp.ge.f32.partialorder %v960, 0.0
        %vm993 = vcmp.ge.f32.partialorder %v961, 0.0
        %vm994 = vcmp.ge.f32.partialorder %v962, 0.0
        %vm995 = vcmp.ge.f32.partialorder %v963, 0.0
        %vm996 = vcmp.ge.f32.partialorder %v964, 0.0
        %vm997 = vcmp.ge.f32.partialorder %v965, 0.0
        %v998 = vmul.f32 %v934, 0.1
        %v999 = vmul.f32 %v935, 0.1
        %v1000 = vmul.f32 %v936, 0.1
        %v1001 = vmul.f32 %v937, 0.1
        %v1002 = vmul.f32 %v938, 0.1
        %v1003 = vmul.f32 %v939, 0.1
        %v1004 = vmul.f32 %v940, 0.1
        %v1005 = vmul.f32 %v941, 0.1
        %v1006 = vmul.f32 %v942, 0.1
        %v1007 = vmul.f32 %v943, 0.1
        %v1008 = vmul.f32 %v944, 0.1
        %v1009 = vmul.f32 %v945, 0.1
        %v1010 = vmul.f32 %v946, 0.1
        %v1011 = vmul.f32 %v947, 0.1
        %v1012 = vmul.f32 %v948, 0.1
        %v1013 = vmul.f32 %v949, 0.1
        %v1014 = vmul.f32 %v950, 0.1
        %v1015 = vmul.f32 %v951, 0.1
        %v1016 = vmul.f32 %v952, 0.1
        %v1017 = vmul.f32 %v953, 0.1
        %v1018 = vmul.f32 %v954, 0.1
        %v1019 = vmul.f32 %v955, 0.1
        %v1020 = vmul.f32 %v956, 0.1
        %v1021 = vmul.f32 %v957, 0.1
        %v1022 = vmul.f32 %v958, 0.1
        %v1023 = vmul.f32 %v959, 0.1
        %v1024 = vmul.f32 %v960, 0.1
        %v1025 = vmul.f32 %v961, 0.1
        %v1026 = vmul.f32 %v962, 0.1
        %v1027 = vmul.f32 %v963, 0.1
        %v1028 = vmul.f32 %v964, 0.1
        %v1029 = vmul.f32 %v965, 0.1
        %v1030 = vsel %vm966, %v934, %v998
        %v1031 = vsel %vm967, %v935, %v999
        %v1032 = vsel %vm968, %v936, %v1000
        %v1033 = vsel %vm969, %v937, %v1001
        %v1034 = vsel %vm970, %v938, %v1002
        %v1035 = vsel %vm971, %v939, %v1003
        %v1036 = vsel %vm972, %v940, %v1004
        %v1037 = vsel %vm973, %v941, %v1005
        %v1038 = vsel %vm974, %v942, %v1006
        %v1039 = vsel %vm975, %v943, %v1007
        %v1040 = vsel %vm976, %v944, %v1008
        %v1041 = vsel %vm977, %v945, %v1009
        %v1042 = vsel %vm978, %v946, %v1010
        %v1043 = vsel %vm979, %v947, %v1011
        %v1044 = vsel %vm980, %v948, %v1012
        %v1045 = vsel %vm981, %v949, %v1013
        %v1046 = vsel %vm982, %v950, %v1014
        %v1047 = vsel %vm983, %v951, %v1015
        %v1048 = vsel %vm984, %v952, %v1016
        %v1049 = vsel %vm985, %v953, %v1017
        %v1050 = vsel %vm986, %v954, %v1018
        %v1051 = vsel %vm987, %v955, %v1019
        %v1052 = vsel %vm988, %v956, %v1020
        %v1053 = vsel %vm989, %v957, %v1021
        %v1054 = vsel %vm990, %v958, %v1022
        %v1055 = vsel %vm991, %v959, %v1023
        %v1056 = vsel %vm992, %v960, %v1024
        %v1057 = vsel %vm993, %v961, %v1025
        %v1058 = vsel %vm994, %v962, %v1026
        %v1059 = vsel %vm995, %v963, %v1027
        %v1060 = vsel %vm996, %v964, %v1028
        %v1061 = vsel %vm997, %v965, %v1029
        %v1062 = vpack.c.bf16 %v1031, %v1030
        %v1063 = vpack.c.bf16 %v1033, %v1032
        %v1064 = vpack.c.bf16 %v1035, %v1034
        %v1065 = vpack.c.bf16 %v1037, %v1036
        %v1066 = vpack.c.bf16 %v1039, %v1038
        %v1067 = vpack.c.bf16 %v1041, %v1040
        %v1068 = vpack.c.bf16 %v1043, %v1042
        %v1069 = vpack.c.bf16 %v1045, %v1044
        %v1070 = vpack.c.bf16 %v1047, %v1046
        %v1071 = vpack.c.bf16 %v1049, %v1048
        %v1072 = vpack.c.bf16 %v1051, %v1050
        %v1073 = vpack.c.bf16 %v1053, %v1052
        %v1074 = vpack.c.bf16 %v1055, %v1054
        %v1075 = vpack.c.bf16 %v1057, %v1056
        %v1076 = vpack.c.bf16 %v1059, %v1058
        %v1077 = vpack.c.bf16 %v1061, %v1060
        %1078 = vst [vmem:[%s215] sm:$0xff] %v1062
        %1079 = vst [vmem:[%s215 + $0x8] sm:$0xff] %v1063
        %1080 = vst [vmem:[%s215 + $0x10] sm:$0xff] %v1064
        %1081 = vst [vmem:[%s215 + $0x18] sm:$0xff] %v1065
        %1082 = vst [vmem:[%s215 + $0x20] sm:$0xff] %v1066
        %1083 = vst [vmem:[%s215 + $0x28] sm:$0xff] %v1067
        %1084 = vst [vmem:[%s215 + $0x30] sm:$0xff] %v1068
        %1085 = vst [vmem:[%s215 + $0x38] sm:$0xff] %v1069
        %1086 = vst [vmem:[%s215 + $0x40] sm:$0xff] %v1070
        %1087 = vst [vmem:[%s215 + $0x48] sm:$0xff] %v1071
        %1088 = vst [vmem:[%s215 + $0x50] sm:$0xff] %v1072
        %1089 = vst [vmem:[%s215 + $0x58] sm:$0xff] %v1073
        %1090 = vst [vmem:[%s215 + $0x60] sm:$0xff] %v1074
        %1091 = vst [vmem:[%s215 + $0x68] sm:$0xff] %v1075
        %1092 = vst [vmem:[%s215 + $0x70] sm:$0xff] %v1076
        %1093 = vst [vmem:[%s215 + $0x78] sm:$0xff] %v1077
        %s1094 = sand.u32 %s118, 1
        %s1095 = scalar_lea.sflag [#allocation4], %s1094
        %s1096 = sand.u32 %s118, 1
        %s1097 = smul.addr %s1096, 128
        %s1098 = scalar_lea.vmem [#allocation5], %s1097
        // Predicated region
        $region37: #{tpu_custom_call.1} parent=31 // pred_check
          %p1099 = pneg %p128
        $region38: #{tpu_custom_call.1} parent=31 // pred_check_branch
          %1101 = sbr.rel (%p1099) target = $region40
        $region39: #{tpu_custom_call.1} parent=31 // pred_region
          %s1102 = smul.u32 16, %s22
          %1104 = vsyncadd %s1095, 0
          %s1105 = smul.addr %s23, 32
          %s1106 = sadd.s32 %s1102, %s1105
          %s1107 = smul.addr %s1106, 4
          %s1108 = scalar_lea.hbm %s3, %s1107
          %s1109 = sshll.u32 %s1098, 4
          %s1110 = int_to_ptr.vmem [resolvable:$true] %s1109
          %s1111 = sshll.u32 %s1108, 4
          %s1112 = int_to_ptr.hbm [resolvable:$true] %s1111
          %1117 = dma.vmem_to_hbm [thread:$0]  %s1110, 2048, %s1112, %s1095, 1024, 1024, 64
        $region40: #{tpu_custom_call.1} parent=31 // pred_fallthru
          _
      $region32: #{tpu_custom_call.1} parent=5 // pred_fallthru
        _
      %p1118 = scmp.le.s32.totalorder 2, %s13
      // Predicated region
      $region41: #{tpu_custom_call.1} parent=5 // pred_check
        %p1119 = pneg %p1118
      $region42: #{tpu_custom_call.1} parent=5 // pred_check_branch
        %1121 = sbr.rel (%p1119) target = $region44
      $region43: #{tpu_custom_call.1} parent=5 // pred_region
        %s1122 = ssub.s32 %s13, 2
        // Predicated region
        $region45: #{tpu_custom_call.1} parent=43 // pred_check
          %p1123 = pneg %p134
        $region46: #{tpu_custom_call.1} parent=43 // pred_check_branch
          %1125 = sbr.rel (%p1123) target = $region48
        $region47: #{tpu_custom_call.1} parent=43 // pred_region
          %s1126 = sand.u32 %s119, 1
          %s1127 = scalar_lea.sflag [#allocation4], %s1126
          %s1128 = sand.u32 %s119, 1
          %s1129 = smul.addr %s1128, 128
          %s1130 = scalar_lea.vmem [#allocation5], %s1129
          %1132 = dma.done %s1127, 2048
        $region48: #{tpu_custom_call.1} parent=43 // pred_fallthru
          _
      $region44: #{tpu_custom_call.1} parent=5 // pred_fallthru
        _
    $region6: #{tpu_custom_call.1} parent=1 // loop_footer
      %s17 = sadd.s32 1, %s13
    $region7: #{tpu_custom_call.1} parent=1 // loop_footer_branch
      %12 = sbr.rel target = $region3
    $region8: #{tpu_custom_call.1} parent=1 // loop_exit
      _
    %1133 = vsyncpa [#allocation3], 1
    %s1134 = scalar_lea.sflag [#allocation3], 1
    %1135 = vsyncpa %s1134, 1
    %1136 = vsyncpa [#allocation4], 1
    %s1137 = scalar_lea.sflag [#allocation4], 1
    %1138 = vsyncpa %s1137, 1

</llo_original>
